<compile_context>
chip_gen: v7x
topology: tpu7x:2x2x1
jax: 0.10.0
libtpu: 0.0.40
codegen_flags: <defaults>
</compile_context>

<pallas_src>
import jax
import jax.numpy as jnp
from jax.experimental import pallas as pl
from jax.experimental.pallas import tpu as pltpu


# ----------------------------------------------------------------------------
# Fused Pallas kernel: encoder MLP + aggregator MLP in one body.
# ----------------------------------------------------------------------------
def _cortex_fused_kernel(x_ref, back_ref,
                         ew1_ref, eb1_ref, ew2_ref, eb2_ref,
                         aw1e_ref, aw1b_ref, ab1_ref, aw2_ref, ab2_ref,
                         enc_out_ref, agg_out_ref):
    x = x_ref[...]                                                     # (Bt, Dinf)

    # --- Encoder: units fused into the N dimension ---------------------------
    h = jnp.dot(x, ew1_ref[...],
                preferred_element_type=jnp.float32) + eb1_ref[...]     # (Bt, U*He)
    h = jnp.maximum(h, 0.0)
    enc = jnp.dot(h, ew2_ref[...],                                      # block-diag W2
                  preferred_element_type=jnp.float32) + eb2_ref[...]   # (Bt, U*Du)
    enc_out_ref[...] = enc.astype(enc_out_ref.dtype)

    # --- Aggregator over [enc.detach() || back] -------------------------------
    # detach() only affects the backward pass; the forward value is unchanged.
    # The concat is fused by splitting aggregator W1 into its enc / back halves.
    back = back_ref[...]                                               # (Bt, Dinb)
    g = (jnp.dot(enc.astype(x.dtype), aw1e_ref[...],
                 preferred_element_type=jnp.float32)
         + jnp.dot(back, aw1b_ref[...],
                   preferred_element_type=jnp.float32)
         + ab1_ref[...])                                               # (Bt, U*Ha)
    g = jnp.maximum(g, 0.0)
    agg = jnp.dot(g, aw2_ref[...],                                      # block-diag W2
                  preferred_element_type=jnp.float32) + ab2_ref[...]   # (Bt, U*Du)
    agg_out_ref[...] = agg.astype(agg_out_ref.dtype)


def cortex_forward_fused(x, back, fused_params, *, batch_tile=None):
    """Run the fused encoder+aggregator forward pass.

    x    : (B, dim_inputs_forward)
    back : (B, dim_inputs_backward)
    returns (enc_outputs, agg_outputs), each (B, num_units * dim_unit)
    """
    (ew1, eb1, ew2, eb2, aw1e, aw1b, ab1, aw2, ab2) = fused_params
    B, dinf = x.shape
    dinb = back.shape[1]
    udo = ew2.shape[1]  # num_units * dim_unit

    # Pad batch to a multiple of 8 sublanes (f32); padded rows are sliced off below.
    Bp = ((B + 7) // 8) * 8
    if Bp != B:
        pad = ((0, Bp - B), (0, 0))
        x = jnp.pad(x, pad)
        back = jnp.pad(back, pad)

    if batch_tile is None:
        if Bp <= 256:
            bt = Bp
        else:
            bt = next(t for t in (256, 128, 64, 32, 16, 8) if Bp % t == 0)
    else:
        bt = batch_tile
    grid = (Bp // bt,)

    def w_spec(arr):
        # Full-array block with a constant block index: loaded once, stays resident.
        return pl.BlockSpec(arr.shape, lambda i: (0, 0))

    enc_out, agg_out = pl.pallas_call(
        _cortex_fused_kernel,
        out_shape=(jax.ShapeDtypeStruct((Bp, udo), x.dtype),
                   jax.ShapeDtypeStruct((Bp, udo), x.dtype)),
        grid=grid,
        in_specs=[
            pl.BlockSpec((bt, dinf), lambda i: (i, 0)),     # x: batch-tiled
            pl.BlockSpec((bt, dinb), lambda i: (i, 0)),     # back: batch-tiled
            w_spec(ew1), w_spec(eb1), w_spec(ew2), w_spec(eb2),
            w_spec(aw1e), w_spec(aw1b), w_spec(ab1), w_spec(aw2), w_spec(ab2),
        ],
        out_specs=(pl.BlockSpec((bt, udo), lambda i: (i, 0)),
                   pl.BlockSpec((bt, udo), lambda i: (i, 0))),
        compiler_params=pltpu.CompilerParams(
            dimension_semantics=("parallel",)),
    )(x, back, ew1, eb1, ew2, eb2, aw1e, aw1b, ab1, aw2, ab2)

    if Bp != B:
        enc_out = enc_out[:B]
        agg_out = agg_out[:B]
    return enc_out, agg_out


# ----------------------------------------------------------------------------
# Parameter init (PyTorch-Linear-style uniform(-1/sqrt(fan_in))) + fused layouts
# ----------------------------------------------------------------------------
def _init_linear_stack(key, num_units, fan_in, fan_out, dtype=jnp.float32):
    kw, kb = jax.random.split(key)
    s = 1.0 / float(fan_in) ** 0.5
    w = jax.random.uniform(kw, (num_units, fan_in, fan_out), dtype, -s, s)
    b = jax.random.uniform(kb, (num_units, fan_out), dtype, -s, s)
    return w, b


def _concat_units(w):
    """(U, Din, H) -> (Din, U*H): all units share the same input -> fuse into N."""
    U, Din, H = w.shape
    return jnp.transpose(w, (1, 0, 2)).reshape(Din, U * H)


def _block_diag_units(w):
    """(U, H, D) -> (U*H, U*D) block-diagonal: per-unit second layer as one matmul."""
    U, H, D = w.shape
    eye = jnp.eye(U, dtype=w.dtype)
    return jnp.einsum('uhd,uv->uhvd', w, eye).reshape(U * H, U * D)


# ----------------------------------------------------------------------------
# Host-side glue: delay-line queue (stateful Python, not a kernel concern)
# ----------------------------------------------------------------------------
class FixedSizeQueue:
    # TODO(synk): exact offer()/peek() semantics of the original FixedSizeQueue are not
    # given; modeled as a fixed-capacity delay line (offer returns the evicted oldest
    # element once full, zeros before that; peek returns the oldest element).
    def __init__(self, size):
        self.size = size
        self.queue = []

    def offer(self, x):
        self.queue.append(x)
        if len(self.queue) > self.size:
            return self.queue.pop(0)
        return jnp.zeros_like(x)

    def peek(self):
        return self.queue[0] if self.queue else None


# ----------------------------------------------------------------------------
# CortexRegion (JAX / Pallas version)
# ----------------------------------------------------------------------------
class CortexRegionPallas:
    def __init__(self, num_units, dim_inputs_forward, dim_inputs_backward,
                 dim_unit, dim_hid_enc_unit, dim_hid_agg_unit, max_bptt,
                 t_inter_region, t_intro_region, key):
        self.num_units = num_units
        self.dim_inputs_forward = dim_inputs_forward
        self.dim_inputs_backward = dim_inputs_backward
        self.dim_unit = dim_unit
        self.dim_outputs = num_units * dim_unit
        self.max_bptt = max_bptt  # training-only (truncated BPTT); unused in forward

        k_e1, k_e2, k_a1, k_a2 = jax.random.split(key, 4)
        # Per-unit stacked parameters (kept for the pure-JAX reference check).
        self.enc_unit = (*_init_linear_stack(k_e1, num_units, dim_inputs_forward,
                                             dim_hid_enc_unit),
                         *_init_linear_stack(k_e2, num_units, dim_hid_enc_unit,
                                             dim_unit))
        din_agg = self.dim_outputs + dim_inputs_backward
        self.agg_unit = (*_init_linear_stack(k_a1, num_units, din_agg,
                                             dim_hid_agg_unit),
                         *_init_linear_stack(k_a2, num_units, dim_hid_agg_unit,
                                             dim_unit))

        ew1_u, eb1_u, ew2_u, eb2_u = self.enc_unit
        aw1_u, ab1_u, aw2_u, ab2_u = self.agg_unit
        # Fused / lane-dense layouts for the kernel (built once at init).
        self.fused_params = (
            _concat_units(ew1_u),                                    # (Dinf, U*He)
            eb1_u.reshape(1, num_units * dim_hid_enc_unit),          # (1, U*He)
            _block_diag_units(ew2_u),                                # (U*He, U*Du)
            eb2_u.reshape(1, num_units * dim_unit),                  # (1, U*Du)
            _concat_units(aw1_u[:, :self.dim_outputs, :]),           # (U*Du, U*Ha)
            _concat_units(aw1_u[:, self.dim_outputs:, :]),           # (Dinb, U*Ha)
            ab1_u.reshape(1, num_units * dim_hid_agg_unit),          # (1, U*Ha)
            _block_diag_units(aw2_u),                                # (U*Ha, U*Du)
            ab2_u.reshape(1, num_units * dim_unit),                  # (1, U*Du)
        )

        self.intro_region_queue = FixedSizeQueue(t_intro_region)
        self.inter_region_queue = FixedSizeQueue(t_inter_region)

    def forward(self, inputs):
        # inputs: (batch, dim_inputs_forward)
        back = self.inter_region_queue.peek()
        if back is None:
            back = jnp.zeros((inputs.shape[0], self.dim_inputs_backward),
                             dtype=inputs.dtype)
        # enc.detach() only matters for autograd; forward values are identical,
        # so encoder + aggregator are computed in one fused pallas_call.
        enc_outputs, agg_outputs = cortex_forward_fused(
            inputs, back, self.fused_params)

        agg_outputs = self.intro_region_queue.offer(agg_outputs)
        agg_outputs_preview = self.intro_region_queue.peek()
        return enc_outputs, agg_outputs, agg_outputs_preview

    def backward(self, inputs_backward):
        self.inter_region_queue.offer(inputs_backward)


# ----------------------------------------------------------------------------
# Pure-JAX per-unit reference (for correctness check only)
# ----------------------------------------------------------------------------
def _reference_forward(x, back, enc_unit, agg_unit):
    ew1, eb1, ew2, eb2 = enc_unit
    aw1, ab1, aw2, ab2 = agg_unit
    B = x.shape[0]
    U, _, Du = ew2.shape
    h = jax.nn.relu(jnp.einsum('bd,udh->buh', x, ew1) + eb1[None])
    enc = jnp.einsum('buh,uhd->bud', h, ew2) + eb2[None]
    enc_flat = enc.reshape(B, U * Du)
    agg_in = jnp.concatenate([enc_flat, back], axis=-1)
    g = jax.nn.relu(jnp.einsum('bd,udh->buh', agg_in, aw1) + ab1[None])
    agg = jnp.einsum('buh,uhd->bud', g, aw2) + ab2[None]
    return enc_flat, agg.reshape(B, U * Du)


# ----------------------------------------------------------------------------
if __name__ == "__main__":
    key = jax.random.PRNGKey(0)
    k_param, k_x, k_back = jax.random.split(key, 3)

    batch = 2
    num_units = 4
    dim_inputs_forward = 32
    dim_inputs_backward = 16
    dim_unit = 8
    dim_hid_enc_unit = 32
    dim_hid_agg_unit = 32

    region = CortexRegionPallas(
        num_units=num_units,
        dim_inputs_forward=dim_inputs_forward,
        dim_inputs_backward=dim_inputs_backward,
        dim_unit=dim_unit,
        dim_hid_enc_unit=dim_hid_enc_unit,
        dim_hid_agg_unit=dim_hid_agg_unit,
        max_bptt=4,
        t_inter_region=2,
        t_intro_region=2,
        key=k_param,
    )

    x = jax.random.normal(k_x, (batch, dim_inputs_forward), dtype=jnp.float32)
    back_in = jax.random.normal(
        k_back, (batch, dim_inputs_backward), dtype=jnp.float32)
    # Prime the inter-region (backward) queue once, as the real system would.
    region.backward(back_in)

    enc_out, agg_out, agg_preview = region.forward(x)
    jax.block_until_ready((enc_out, agg_out, agg_preview))

    assert enc_out.shape == (batch, num_units * dim_unit)
    assert agg_out.shape == (batch, num_units * dim_unit)
    assert agg_preview.shape == (batch, num_units * dim_unit)

    # Correctness check against the per-unit pure-JAX reference.
    ref_enc, ref_agg = _reference_forward(x, back_in, region.enc_unit,
                                          region.agg_unit)
    assert jnp.allclose(enc_out, ref_enc, atol=1e-2, rtol=1e-2)
    # agg_preview holds the raw aggregator output (first element of the delay line).
    assert jnp.allclose(agg_preview, ref_agg, atol=1e-2, rtol=1e-2)

    print("KERNEL_OK")
</pallas_src>

<mosaic_0001>
module attributes {stable_mosaic.version = 11 : i64} {
  func.func @_cortex_fused_kernel(%arg0: i32, %arg1: memref<8x32xf32, #tpu.memory_space<vmem>>, %arg2: memref<8x16xf32, #tpu.memory_space<vmem>>, %arg3: memref<32x128xf32, #tpu.memory_space<vmem>>, %arg4: memref<1x128xf32, #tpu.memory_space<vmem>>, %arg5: memref<128x32xf32, #tpu.memory_space<vmem>>, %arg6: memref<1x32xf32, #tpu.memory_space<vmem>>, %arg7: memref<32x128xf32, #tpu.memory_space<vmem>>, %arg8: memref<16x128xf32, #tpu.memory_space<vmem>>, %arg9: memref<1x128xf32, #tpu.memory_space<vmem>>, %arg10: memref<128x32xf32, #tpu.memory_space<vmem>>, %arg11: memref<1x32xf32, #tpu.memory_space<vmem>>, %arg12: memref<8x32xf32, #tpu.memory_space<vmem>>, %arg13: memref<8x32xf32, #tpu.memory_space<vmem>>) attributes {dimension_semantics = [#tpu.dimension_semantics<parallel>], iteration_bounds = array<i64: 1>, scalar_prefetch = 0 : i64, scratch_operands = 0 : i64, tpu.core_type = #tpu.core_type<tc>, window_params = [{transform_indices = @transform_0, window_bounds = array<i64: 8, 32>}, {transform_indices = @transform_1, window_bounds = array<i64: 8, 16>}, {pipeline_mode = #tpu.pipeline_mode<synchronous>, transform_indices = @transform_2, window_bounds = array<i64: 32, 128>}, {pipeline_mode = #tpu.pipeline_mode<synchronous>, transform_indices = @transform_3, window_bounds = array<i64: 1, 128>}, {pipeline_mode = #tpu.pipeline_mode<synchronous>, transform_indices = @transform_4, window_bounds = array<i64: 128, 32>}, {pipeline_mode = #tpu.pipeline_mode<synchronous>, transform_indices = @transform_5, window_bounds = array<i64: 1, 32>}, {pipeline_mode = #tpu.pipeline_mode<synchronous>, transform_indices = @transform_6, window_bounds = array<i64: 32, 128>}, {pipeline_mode = #tpu.pipeline_mode<synchronous>, transform_indices = @transform_7, window_bounds = array<i64: 16, 128>}, {pipeline_mode = #tpu.pipeline_mode<synchronous>, transform_indices = @transform_8, window_bounds = array<i64: 1, 128>}, {pipeline_mode = #tpu.pipeline_mode<synchronous>, transform_indices = @transform_9, window_bounds = array<i64: 128, 32>}, {pipeline_mode = #tpu.pipeline_mode<synchronous>, transform_indices = @transform_10, window_bounds = array<i64: 1, 32>}, {transform_indices = @transform_11, window_bounds = array<i64: 8, 32>}, {transform_indices = @transform_12, window_bounds = array<i64: 8, 32>}]} {
    %c0 = arith.constant 0 : index
    %c0_0 = arith.constant 0 : index
    %0 = vector.load %arg1[%c0, %c0_0] : memref<8x32xf32, #tpu.memory_space<vmem>>, vector<8x32xf32>
    %c0_1 = arith.constant 0 : index
    %c0_2 = arith.constant 0 : index
    %1 = vector.load %arg3[%c0_1, %c0_2] : memref<32x128xf32, #tpu.memory_space<vmem>>, vector<32x128xf32>
    %cst = arith.constant dense<0.000000e+00> : vector<8x128xf32>
    %2 = tpu.matmul %0, %1, %cst {dimension_numbers = #tpu.dot_dimension_numbers<[1], [0], [0], [1], [0, 0, 1, 1], [], []>} : vector<8x32xf32>, vector<32x128xf32>, vector<8x128xf32> -> vector<8x128xf32>
    %c0_3 = arith.constant 0 : index
    %c0_4 = arith.constant 0 : index
    %3 = vector.load %arg4[%c0_3, %c0_4] : memref<1x128xf32, #tpu.memory_space<vmem>>, vector<1x128xf32>
    %4 = vector.broadcast %3 : vector<1x128xf32> to vector<8x128xf32>
    %5 = arith.addf %2, %4 : vector<8x128xf32>
    %cst_5 = arith.constant 0.000000e+00 : f32
    %6 = vector.broadcast %cst_5 : f32 to vector<8x128xf32>
    %7 = arith.maximumf %5, %6 : vector<8x128xf32>
    %c0_6 = arith.constant 0 : index
    %c0_7 = arith.constant 0 : index
    %8 = vector.load %arg5[%c0_6, %c0_7] : memref<128x32xf32, #tpu.memory_space<vmem>>, vector<128x32xf32>
    %cst_8 = arith.constant dense<0.000000e+00> : vector<8x32xf32>
    %9 = tpu.matmul %7, %8, %cst_8 {dimension_numbers = #tpu.dot_dimension_numbers<[1], [0], [0], [1], [0, 0, 1, 1], [], []>} : vector<8x128xf32>, vector<128x32xf32>, vector<8x32xf32> -> vector<8x32xf32>
    %c0_9 = arith.constant 0 : index
    %c0_10 = arith.constant 0 : index
    %10 = vector.load %arg6[%c0_9, %c0_10] : memref<1x32xf32, #tpu.memory_space<vmem>>, vector<1x32xf32>
    %11 = vector.broadcast %10 : vector<1x32xf32> to vector<8x32xf32>
    %12 = arith.addf %9, %11 : vector<8x32xf32>
    %c0_11 = arith.constant 0 : index
    %c0_12 = arith.constant 0 : index
    %13 = vector.load %arg12[%c0_11, %c0_12] : memref<8x32xf32, #tpu.memory_space<vmem>>, vector<8x32xf32>
    tpu.vector_store %arg12[%c0_11, %c0_12], %12 {strides = array<i32>} : memref<8x32xf32, #tpu.memory_space<vmem>>, vector<8x32xf32>,
    %c0_13 = arith.constant 0 : index
    %c0_14 = arith.constant 0 : index
    %14 = vector.load %arg2[%c0_13, %c0_14] : memref<8x16xf32, #tpu.memory_space<vmem>>, vector<8x16xf32>
    %c0_15 = arith.constant 0 : index
    %c0_16 = arith.constant 0 : index
    %15 = vector.load %arg7[%c0_15, %c0_16] : memref<32x128xf32, #tpu.memory_space<vmem>>, vector<32x128xf32>
    %cst_17 = arith.constant dense<0.000000e+00> : vector<8x128xf32>
    %16 = tpu.matmul %12, %15, %cst_17 {dimension_numbers = #tpu.dot_dimension_numbers<[1], [0], [0], [1], [0, 0, 1, 1], [], []>} : vector<8x32xf32>, vector<32x128xf32>, vector<8x128xf32> -> vector<8x128xf32>
    %c0_18 = arith.constant 0 : index
    %c0_19 = arith.constant 0 : index
    %17 = vector.load %arg8[%c0_18, %c0_19] : memref<16x128xf32, #tpu.memory_space<vmem>>, vector<16x128xf32>
    %cst_20 = arith.constant dense<0.000000e+00> : vector<8x128xf32>
    %18 = tpu.matmul %14, %17, %cst_20 {dimension_numbers = #tpu.dot_dimension_numbers<[1], [0], [0], [1], [0, 0, 1, 1], [], []>} : vector<8x16xf32>, vector<16x128xf32>, vector<8x128xf32> -> vector<8x128xf32>
    %19 = arith.addf %16, %18 : vector<8x128xf32>
    %c0_21 = arith.constant 0 : index
    %c0_22 = arith.constant 0 : index
    %20 = vector.load %arg9[%c0_21, %c0_22] : memref<1x128xf32, #tpu.memory_space<vmem>>, vector<1x128xf32>
    %21 = vector.broadcast %20 : vector<1x128xf32> to vector<8x128xf32>
    %22 = arith.addf %19, %21 : vector<8x128xf32>
    %cst_23 = arith.constant 0.000000e+00 : f32
    %23 = vector.broadcast %cst_23 : f32 to vector<8x128xf32>
    %24 = arith.maximumf %22, %23 : vector<8x128xf32>
    %c0_24 = arith.constant 0 : index
    %c0_25 = arith.constant 0 : index
    %25 = vector.load %arg10[%c0_24, %c0_25] : memref<128x32xf32, #tpu.memory_space<vmem>>, vector<128x32xf32>
    %cst_26 = arith.constant dense<0.000000e+00> : vector<8x32xf32>
    %26 = tpu.matmul %24, %25, %cst_26 {dimension_numbers = #tpu.dot_dimension_numbers<[1], [0], [0], [1], [0, 0, 1, 1], [], []>} : vector<8x128xf32>, vector<128x32xf32>, vector<8x32xf32> -> vector<8x32xf32>
    %c0_27 = arith.constant 0 : index
    %c0_28 = arith.constant 0 : index
    %27 = vector.load %arg11[%c0_27, %c0_28] : memref<1x32xf32, #tpu.memory_space<vmem>>, vector<1x32xf32>
    %28 = vector.broadcast %27 : vector<1x32xf32> to vector<8x32xf32>
    %29 = arith.addf %26, %28 : vector<8x32xf32>
    %c0_29 = arith.constant 0 : index
    %c0_30 = arith.constant 0 : index
    %30 = vector.load %arg13[%c0_29, %c0_30] : memref<8x32xf32, #tpu.memory_space<vmem>>, vector<8x32xf32>
    tpu.vector_store %arg13[%c0_29, %c0_30], %29 {strides = array<i32>} : memref<8x32xf32, #tpu.memory_space<vmem>>, vector<8x32xf32>,
    return
  }
  func.func @transform_0(%arg0: i32) -> (i32, i32) {
    %c0_i32 = arith.constant 0 : i32
    %c0_i32_0 = arith.constant 0 : i32
    return %arg0, %c0_i32 : i32, i32
  }
  func.func @transform_1(%arg0: i32) -> (i32, i32) {
    %c0_i32 = arith.constant 0 : i32
    %c0_i32_0 = arith.constant 0 : i32
    return %arg0, %c0_i32 : i32, i32
  }
  func.func @transform_2(%arg0: i32) -> (i32, i32) {
    %c0_i32 = arith.constant 0 : i32
    %c0_i32_0 = arith.constant 0 : i32
    %c0_i32_1 = arith.constant 0 : i32
    return %c0_i32, %c0_i32_0 : i32, i32
  }
  func.func @transform_3(%arg0: i32) -> (i32, i32) {
    %c0_i32 = arith.constant 0 : i32
    %c0_i32_0 = arith.constant 0 : i32
    %c0_i32_1 = arith.constant 0 : i32
    return %c0_i32, %c0_i32_0 : i32, i32
  }
  func.func @transform_4(%arg0: i32) -> (i32, i32) {
    %c0_i32 = arith.constant 0 : i32
    %c0_i32_0 = arith.constant 0 : i32
    %c0_i32_1 = arith.constant 0 : i32
    return %c0_i32, %c0_i32_0 : i32, i32
  }
  func.func @transform_5(%arg0: i32) -> (i32, i32) {
    %c0_i32 = arith.constant 0 : i32
    %c0_i32_0 = arith.constant 0 : i32
    %c0_i32_1 = arith.constant 0 : i32
    return %c0_i32, %c0_i32_0 : i32, i32
  }
  func.func @transform_6(%arg0: i32) -> (i32, i32) {
    %c0_i32 = arith.constant 0 : i32
    %c0_i32_0 = arith.constant 0 : i32
    %c0_i32_1 = arith.constant 0 : i32
    return %c0_i32, %c0_i32_0 : i32, i32
  }
  func.func @transform_7(%arg0: i32) -> (i32, i32) {
    %c0_i32 = arith.constant 0 : i32
    %c0_i32_0 = arith.constant 0 : i32
    %c0_i32_1 = arith.constant 0 : i32
    return %c0_i32, %c0_i32_0 : i32, i32
  }
  func.func @transform_8(%arg0: i32) -> (i32, i32) {
    %c0_i32 = arith.constant 0 : i32
    %c0_i32_0 = arith.constant 0 : i32
    %c0_i32_1 = arith.constant 0 : i32
    return %c0_i32, %c0_i32_0 : i32, i32
  }
  func.func @transform_9(%arg0: i32) -> (i32, i32) {
    %c0_i32 = arith.constant 0 : i32
    %c0_i32_0 = arith.constant 0 : i32
    %c0_i32_1 = arith.constant 0 : i32
    return %c0_i32, %c0_i32_0 : i32, i32
  }
  func.func @transform_10(%arg0: i32) -> (i32, i32) {
    %c0_i32 = arith.constant 0 : i32
    %c0_i32_0 = arith.constant 0 : i32
    %c0_i32_1 = arith.constant 0 : i32
    return %c0_i32, %c0_i32_0 : i32, i32
  }
  func.func @transform_11(%arg0: i32) -> (i32, i32) {
    %c0_i32 = arith.constant 0 : i32
    %c0_i32_0 = arith.constant 0 : i32
    return %arg0, %c0_i32 : i32, i32
  }
  func.func @transform_12(%arg0: i32) -> (i32, i32) {
    %c0_i32 = arith.constant 0 : i32
    %c0_i32_0 = arith.constant 0 : i32
    return %arg0, %c0_i32 : i32, i32
  }
}

</mosaic_0001>

<llo_original>
// kernel: tpu_custom_call.1
$region0: #{tpu_custom_call.1}
  #allocation0 [shape = 'u32[]', space=smem, size = 0x4, offset = 0x4, fixed_abs, tag = 'smem constant byte address 0x4 - core index']
  #allocation1 [shape = 'u32[144,128]{1,0:T(1,128)}', space=vmem, size = 0x12000, scoped, tag = 'internal scratch']
  %s0 = inlined_call_operand.vmem [shape: f32[8,32], index: 0, kind: input, shape index: {}]
  %s1 = inlined_call_operand.vmem [shape: f32[8,16], index: 1, kind: input, shape index: {}]
  %s2 = inlined_call_operand.vmem [shape: f32[32,128], index: 2, kind: input, shape index: {}]
  %s3 = inlined_call_operand.vmem [shape: f32[1,128], index: 3, kind: input, shape index: {}]
  %s4 = inlined_call_operand.vmem [shape: f32[128,32], index: 4, kind: input, shape index: {}]
  %s5 = inlined_call_operand.vmem [shape: f32[1,32], index: 5, kind: input, shape index: {}]
  %s6 = inlined_call_operand.vmem [shape: f32[32,128], index: 6, kind: input, shape index: {}]
  %s7 = inlined_call_operand.vmem [shape: f32[16,128], index: 7, kind: input, shape index: {}]
  %s8 = inlined_call_operand.vmem [shape: f32[1,128], index: 8, kind: input, shape index: {}]
  %s9 = inlined_call_operand.vmem [shape: f32[128,32], index: 9, kind: input, shape index: {}]
  %s10 = inlined_call_operand.vmem [shape: f32[1,32], index: 10, kind: input, shape index: {}]
  %s11 = inlined_call_operand.hbm [shape: f32[8,32], index: 11, kind: output, shape index: {0}]
  %s12 = inlined_call_operand.hbm [shape: f32[8,32], index: 12, kind: output, shape index: {1}]
  %13 = xla_tuple %s11, %s12
  %s14 = sld [smem:[#allocation0]]
  $region62: #{tpu_custom_call.1} parent=0
    _
  %s16 = ssub.s32 1, %s14
  %s17 = scalar_select 0, %s16, %s14
  $region1: #{tpu_custom_call.1} parent=0
    #allocation2 [shape = 'u8[4096]{0}', space=vmem, size = 0x1000, scoped, tag = 'output window, operand 0, single buffered']
    #allocation3 [shape = 's32[1]{0}', space=sflag, size = 0x4, scoped, tag = 'scoped memory for tpu_custom_call.1']
    #allocation4 [shape = 'u8[4096]{0}', space=vmem, size = 0x1000, scoped, tag = 'output window, operand 1, single buffered']
    #allocation5 [shape = 's32[1]{0}', space=sflag, size = 0x4, scoped, tag = 'scoped memory for tpu_custom_call.1']
    %18 = vsyncpa [#allocation3], 0
    %19 = vsyncpa [#allocation5], 0
    // Predicated region
    $region2: #{tpu_custom_call.1} parent=1 // pred_check
      _
    $region3: #{tpu_custom_call.1} parent=1 // pred_check_branch
      %21 = sbr.rel (0) target = $region5
    $region4: #{tpu_custom_call.1} parent=1 // pred_region
      _
    $region5: #{tpu_custom_call.1} parent=1 // pred_fallthru
      _
    // Predicated region
    $region6: #{tpu_custom_call.1} parent=1 // pred_check
      _
    $region7: #{tpu_custom_call.1} parent=1 // pred_check_branch
      %23 = sbr.rel (0) target = $region9
    $region8: #{tpu_custom_call.1} parent=1 // pred_region
      _
    $region9: #{tpu_custom_call.1} parent=1 // pred_fallthru
      _
    // Predicated region
    $region10: #{tpu_custom_call.1} parent=1 // pred_check
      _
    $region11: #{tpu_custom_call.1} parent=1 // pred_check_branch
      %25 = sbr.rel (0) target = $region13
    $region12: #{tpu_custom_call.1} parent=1 // pred_region
      _
    $region13: #{tpu_custom_call.1} parent=1 // pred_fallthru
      _
    // Predicated region
    $region14: #{tpu_custom_call.1} parent=1 // pred_check
      _
    $region15: #{tpu_custom_call.1} parent=1 // pred_check_branch
      %27 = sbr.rel (0) target = $region17
    $region16: #{tpu_custom_call.1} parent=1 // pred_region
      _
    $region17: #{tpu_custom_call.1} parent=1 // pred_fallthru
      _
    // Predicated region
    $region18: #{tpu_custom_call.1} parent=1 // pred_check
      _
    $region19: #{tpu_custom_call.1} parent=1 // pred_check_branch
      %29 = sbr.rel (0) target = $region21
    $region20: #{tpu_custom_call.1} parent=1 // pred_region
      _
    $region21: #{tpu_custom_call.1} parent=1 // pred_fallthru
      _
    // Predicated region
    $region22: #{tpu_custom_call.1} parent=1 // pred_check
      _
    $region23: #{tpu_custom_call.1} parent=1 // pred_check_branch
      %31 = sbr.rel (0) target = $region25
    $region24: #{tpu_custom_call.1} parent=1 // pred_region
      _
    $region25: #{tpu_custom_call.1} parent=1 // pred_fallthru
      _
    // Predicated region
    $region26: #{tpu_custom_call.1} parent=1 // pred_check
      _
    $region27: #{tpu_custom_call.1} parent=1 // pred_check_branch
      %33 = sbr.rel (0) target = $region29
    $region28: #{tpu_custom_call.1} parent=1 // pred_region
      _
    $region29: #{tpu_custom_call.1} parent=1 // pred_fallthru
      _
    // Predicated region
    $region30: #{tpu_custom_call.1} parent=1 // pred_check
      _
    $region31: #{tpu_custom_call.1} parent=1 // pred_check_branch
      %35 = sbr.rel (0) target = $region33
    $region32: #{tpu_custom_call.1} parent=1 // pred_region
      _
    $region33: #{tpu_custom_call.1} parent=1 // pred_fallthru
      _
    // Predicated region
    $region34: #{tpu_custom_call.1} parent=1 // pred_check
      _
    $region35: #{tpu_custom_call.1} parent=1 // pred_check_branch
      %37 = sbr.rel (0) target = $region37
    $region36: #{tpu_custom_call.1} parent=1 // pred_region
      _
    $region37: #{tpu_custom_call.1} parent=1 // pred_fallthru
      _
    // Predicated region
    $region38: #{tpu_custom_call.1} parent=1 // pred_check
      _
    $region39: #{tpu_custom_call.1} parent=1 // pred_check_branch
      %39 = sbr.rel (0) target = $region41
    $region40: #{tpu_custom_call.1} parent=1 // pred_region
      _
    $region41: #{tpu_custom_call.1} parent=1 // pred_fallthru
      _
    // Predicated region
    $region42: #{tpu_custom_call.1} parent=1 // pred_check
      _
    $region43: #{tpu_custom_call.1} parent=1 // pred_check_branch
      %41 = sbr.rel (0) target = $region45
    $region44: #{tpu_custom_call.1} parent=1 // pred_region
      _
    $region45: #{tpu_custom_call.1} parent=1 // pred_fallthru
      _
    %v42 = vld [vmem:[%s0] sm:$0xff]
    %v43 = vld [vmem:[%s2] sm:$0xff]
    %v44 = vld [vmem:[%s2 + $0x8] sm:$0xff]
    %v45 = vld [vmem:[%s2 + $0x10] sm:$0xff]
    %v46 = vld [vmem:[%s2 + $0x18] sm:$0xff]
    %v47 = vld [vmem:[%s3] sm:$0x1]
    %v49 = vlaneseq
    %v50 = vshrl.u32 %v49, 7
    %v51 = vsub.s32 0, %v50
    %v52 = vrot.slane %v47, %v51
    %vm54 = vcmask 261120
    %v56 = vsel %vm54, %v42, 0
    %58 = vmatprep.subr.mxu0 0.0
    %59 = vmatpush1.msra.mxu0 %v43
    %60 = vmatprep.subr.mxu0 0.0
    %61 = vmatpush1.msra.mxu0 %v44
    %62 = vmatprep.subr.mxu0 0.0
    %63 = vmatpush1.msra.mxu0 %v45
    %64 = vmatprep.subr.mxu0 0.0
    %65 = vmatpush1.msra.mxu0 %v46
    %66 = vmatprep.subr.mxu0 0.0
    %67 = vmatpush1.msra.mxu0 0.0
    %68 = vmatprep.subr.mxu0 0.0
    %69 = vmatpush1.msra.mxu0 0.0
    %70 = vmatprep.subr.mxu0 0.0
    %71 = vmatpush1.msra.mxu0 0.0
    %72 = vmatprep.subr.mxu0 0.0
    %73 = vmatpush1.msra.mxu0 0.0
    %74 = vmatprep.subr.mxu0 0.0
    %75 = vmatpush1.msra.mxu0 0.0
    %76 = vmatprep.subr.mxu0 0.0
    %77 = vmatpush1.msra.mxu0 0.0
    %78 = vmatprep.subr.mxu0 0.0
    %79 = vmatpush1.msra.mxu0 0.0
    %80 = vmatprep.subr.mxu0 0.0
    %81 = vmatpush1.msra.mxu0 0.0
    %82 = vmatprep.subr.mxu0 0.0
    %83 = vmatpush1.msra.mxu0 0.0
    %84 = vmatprep.subr.mxu0 0.0
    %85 = vmatpush1.msra.mxu0 0.0
    %86 = vmatprep.subr.mxu0 0.0
    %87 = vmatpush1.msra.mxu0 0.0
    %88 = vmatprep.subr.mxu0 0.0
    %89 = vmatpush1.msra.mxu0 0.0
    %90 = vmatprep.subr.mxu0 0.0
    %91 = vmatpush1.msra.mxu0 0.0
    %92 = vmatprep.subr.mxu0 0.0
    %93 = vmatpush1.msra.mxu0 0.0
    %94 = vmatprep.subr.mxu0 0.0
    %95 = vmatpush1.msra.mxu0 0.0
    %96 = vmatprep.subr.mxu0 0.0
    %97 = vmatpush1.msra.mxu0 0.0
    %98 = vmatprep.subr.mxu0 0.0
    %99 = vmatpush1.msra.mxu0 0.0
    %100 = vmatprep.subr.mxu0 0.0
    %101 = vmatpush1.msra.mxu0 0.0
    %102 = vmatprep.subr.mxu0 0.0
    %103 = vmatpush1.msra.mxu0 0.0
    %104 = vmatprep.subr.mxu0 0.0
    %105 = vmatpush1.msra.mxu0 0.0
    %106 = vmatprep.subr.mxu0 0.0
    %107 = vmatpush1.msra.mxu0 0.0
    %108 = vmatprep.subr.mxu0 0.0
    %109 = vmatpush1.msra.mxu0 0.0
    %110 = vmatprep.subr.mxu0 0.0
    %111 = vmatpush1.msra.mxu0 0.0
    %112 = vmatprep.subr.mxu0 0.0
    %113 = vmatpush1.msra.mxu0 0.0
    %114 = vmatprep.subr.mxu0 0.0
    %115 = vmatpush1.msra.mxu0 0.0
    %116 = vmatprep.subr.mxu0 0.0
    %117 = vmatpush1.msra.mxu0 0.0
    %118 = vmatprep.subr.mxu0 0.0
    %119 = vmatpush1.msra.mxu0 0.0
    %120 = vmatprep.subr.mxu0 0.0
    %121 = vmatpush1.msra.mxu0 0.0
    %122 = vmatprep.mubr.f32.mxu0 0.0
    %123 = vmatmul.mubr.f32.gmra.mrb[0].mxu0 %v56
    %v124 = vpop.f32.mrb[0].mxu0
    %v125 = vadd.f32 %v52, %v124
    %v126 = vpop.f32.mrb[0].mxu0
    %127 = vdwg.mxu0
    %v128 = vmax.f32 %v125, 0.0
    %v129 = vld [vmem:[%s4] sm:$0xff]
    %v130 = vld [vmem:[%s4 + $0x8] sm:$0xff]
    %v131 = vld [vmem:[%s4 + $0x10] sm:$0xff]
    %v132 = vld [vmem:[%s4 + $0x18] sm:$0xff]
    %v133 = vld [vmem:[%s4 + $0x20] sm:$0xff]
    %v134 = vld [vmem:[%s4 + $0x28] sm:$0xff]
    %v135 = vld [vmem:[%s4 + $0x30] sm:$0xff]
    %v136 = vld [vmem:[%s4 + $0x38] sm:$0xff]
    %v137 = vld [vmem:[%s4 + $0x40] sm:$0xff]
    %v138 = vld [vmem:[%s4 + $0x48] sm:$0xff]
    %v139 = vld [vmem:[%s4 + $0x50] sm:$0xff]
    %v140 = vld [vmem:[%s4 + $0x58] sm:$0xff]
    %v141 = vld [vmem:[%s4 + $0x60] sm:$0xff]
    %v142 = vld [vmem:[%s4 + $0x68] sm:$0xff]
    %v143 = vld [vmem:[%s4 + $0x70] sm:$0xff]
    %v144 = vld [vmem:[%s4 + $0x78] sm:$0xff]
    %v145 = vld [vmem:[%s5] sm:$0x1]
    %v147 = vlaneseq
    %v148 = vshrl.u32 %v147, 7
    %v149 = vsub.s32 0, %v148
    %v150 = vrot.slane %v145, %v149
    %152 = vmatprep.subr.mxu0 0.0
    %153 = vmatpush1.msra.mxu0 %v129
    %154 = vmatprep.subr.mxu0 0.0
    %155 = vmatpush1.msra.mxu0 %v130
    %156 = vmatprep.subr.mxu0 0.0
    %157 = vmatpush1.msra.mxu0 %v131
    %158 = vmatprep.subr.mxu0 0.0
    %159 = vmatpush1.msra.mxu0 %v132
    %160 = vmatprep.subr.mxu0 0.0
    %161 = vmatpush1.msra.mxu0 %v133
    %162 = vmatprep.subr.mxu0 0.0
    %163 = vmatpush1.msra.mxu0 %v134
    %164 = vmatprep.subr.mxu0 0.0
    %165 = vmatpush1.msra.mxu0 %v135
    %166 = vmatprep.subr.mxu0 0.0
    %167 = vmatpush1.msra.mxu0 %v136
    %168 = vmatprep.subr.mxu0 0.0
    %169 = vmatpush1.msra.mxu0 %v137
    %170 = vmatprep.subr.mxu0 0.0
    %171 = vmatpush1.msra.mxu0 %v138
    %172 = vmatprep.subr.mxu0 0.0
    %173 = vmatpush1.msra.mxu0 %v139
    %174 = vmatprep.subr.mxu0 0.0
    %175 = vmatpush1.msra.mxu0 %v140
    %176 = vmatprep.subr.mxu0 0.0
    %177 = vmatpush1.msra.mxu0 %v141
    %178 = vmatprep.subr.mxu0 0.0
    %179 = vmatpush1.msra.mxu0 %v142
    %180 = vmatprep.subr.mxu0 0.0
    %181 = vmatpush1.msra.mxu0 %v143
    %182 = vmatprep.subr.mxu0 0.0
    %183 = vmatpush1.msra.mxu0 %v144
    %184 = vmatprep.subr.mxu0 0.0
    %185 = vmatpush1.msra.mxu0 0.0
    %186 = vmatprep.subr.mxu0 0.0
    %187 = vmatpush1.msra.mxu0 0.0
    %188 = vmatprep.subr.mxu0 0.0
    %189 = vmatpush1.msra.mxu0 0.0
    %190 = vmatprep.subr.mxu0 0.0
    %191 = vmatpush1.msra.mxu0 0.0
    %192 = vmatprep.subr.mxu0 0.0
    %193 = vmatpush1.msra.mxu0 0.0
    %194 = vmatprep.subr.mxu0 0.0
    %195 = vmatpush1.msra.mxu0 0.0
    %196 = vmatprep.subr.mxu0 0.0
    %197 = vmatpush1.msra.mxu0 0.0
    %198 = vmatprep.subr.mxu0 0.0
    %199 = vmatpush1.msra.mxu0 0.0
    %200 = vmatprep.subr.mxu0 0.0
    %201 = vmatpush1.msra.mxu0 0.0
    %202 = vmatprep.subr.mxu0 0.0
    %203 = vmatpush1.msra.mxu0 0.0
    %204 = vmatprep.subr.mxu0 0.0
    %205 = vmatpush1.msra.mxu0 0.0
    %206 = vmatprep.subr.mxu0 0.0
    %207 = vmatpush1.msra.mxu0 0.0
    %208 = vmatprep.subr.mxu0 0.0
    %209 = vmatpush1.msra.mxu0 0.0
    %210 = vmatprep.subr.mxu0 0.0
    %211 = vmatpush1.msra.mxu0 0.0
    %212 = vmatprep.subr.mxu0 0.0
    %213 = vmatpush1.msra.mxu0 0.0
    %214 = vmatprep.subr.mxu0 0.0
    %215 = vmatpush1.msra.mxu0 0.0
    %216 = vmatprep.mubr.f32.mxu0 0.0
    %217 = vmatmul.mubr.f32.gmra.mrb[0].mxu0 %v128
    %v218 = vpop.f32.mrb[0].mxu0
    %v219 = vadd.f32 %v150, %v218
    %v220 = vpop.f32.mrb[0].mxu0
    %221 = vdwg.mxu0
    %222 = vst.msk [vmem:[#allocation2] sm:$0xff] %vm54, %v219
    %v223 = vld [vmem:[%s1] sm:$0xff]
    %v224 = vld [vmem:[%s6] sm:$0xff]
    %v225 = vld [vmem:[%s6 + $0x8] sm:$0xff]
    %v226 = vld [vmem:[%s6 + $0x10] sm:$0xff]
    %v227 = vld [vmem:[%s6 + $0x18] sm:$0xff]
    %v228 = vld [vmem:[%s7] sm:$0xff]
    %v229 = vld [vmem:[%s7 + $0x8] sm:$0xff]
    %vm230 = vcmask 130048
    %v232 = vsel %vm230, %v223, 0
    %234 = vmatprep.subr.mxu0 0.0
    %235 = vmatpush1.msra.mxu0 %v228
    %236 = vmatprep.subr.mxu0 0.0
    %237 = vmatpush1.msra.mxu0 %v229
    %238 = vmatprep.subr.mxu0 0.0
    %239 = vmatpush1.msra.mxu0 0.0
    %240 = vmatprep.subr.mxu0 0.0
    %241 = vmatpush1.msra.mxu0 0.0
    %242 = vmatprep.subr.mxu0 0.0
    %243 = vmatpush1.msra.mxu0 0.0
    %244 = vmatprep.subr.mxu0 0.0
    %245 = vmatpush1.msra.mxu0 0.0
    %246 = vmatprep.subr.mxu0 0.0
    %247 = vmatpush1.msra.mxu0 0.0
    %248 = vmatprep.subr.mxu0 0.0
    %249 = vmatpush1.msra.mxu0 0.0
    %250 = vmatprep.subr.mxu0 0.0
    %251 = vmatpush1.msra.mxu0 0.0
    %252 = vmatprep.subr.mxu0 0.0
    %253 = vmatpush1.msra.mxu0 0.0
    %254 = vmatprep.subr.mxu0 0.0
    %255 = vmatpush1.msra.mxu0 0.0
    %256 = vmatprep.subr.mxu0 0.0
    %257 = vmatpush1.msra.mxu0 0.0
    %258 = vmatprep.subr.mxu0 0.0
    %259 = vmatpush1.msra.mxu0 0.0
    %260 = vmatprep.subr.mxu0 0.0
    %261 = vmatpush1.msra.mxu0 0.0
    %262 = vmatprep.subr.mxu0 0.0
    %263 = vmatpush1.msra.mxu0 0.0
    %264 = vmatprep.subr.mxu0 0.0
    %265 = vmatpush1.msra.mxu0 0.0
    %266 = vmatprep.subr.mxu0 0.0
    %267 = vmatpush1.msra.mxu0 0.0
    %268 = vmatprep.subr.mxu0 0.0
    %269 = vmatpush1.msra.mxu0 0.0
    %270 = vmatprep.subr.mxu0 0.0
    %271 = vmatpush1.msra.mxu0 0.0
    %272 = vmatprep.subr.mxu0 0.0
    %273 = vmatpush1.msra.mxu0 0.0
    %274 = vmatprep.subr.mxu0 0.0
    %275 = vmatpush1.msra.mxu0 0.0
    %276 = vmatprep.subr.mxu0 0.0
    %277 = vmatpush1.msra.mxu0 0.0
    %278 = vmatprep.subr.mxu0 0.0
    %279 = vmatpush1.msra.mxu0 0.0
    %280 = vmatprep.subr.mxu0 0.0
    %281 = vmatpush1.msra.mxu0 0.0
    %282 = vmatprep.subr.mxu0 0.0
    %283 = vmatpush1.msra.mxu0 0.0
    %284 = vmatprep.subr.mxu0 0.0
    %285 = vmatpush1.msra.mxu0 0.0
    %286 = vmatprep.subr.mxu0 0.0
    %287 = vmatpush1.msra.mxu0 0.0
    %288 = vmatprep.subr.mxu0 0.0
    %289 = vmatpush1.msra.mxu0 0.0
    %290 = vmatprep.subr.mxu0 0.0
    %291 = vmatpush1.msra.mxu0 0.0
    %292 = vmatprep.subr.mxu0 0.0
    %293 = vmatpush1.msra.mxu0 0.0
    %294 = vmatprep.subr.mxu0 0.0
    %295 = vmatpush1.msra.mxu0 0.0
    %296 = vmatprep.subr.mxu0 0.0
    %297 = vmatpush1.msra.mxu0 0.0
    %298 = vmatprep.mubr.f32.mxu0 0.0
    %299 = vmatmul.mubr.f32.gmra.mrb[0].mxu0 %v232
    %v300 = vpop.f32.mrb[0].mxu0
    %v301 = vadd.f32 0.0, %v300
    %v302 = vpop.f32.mrb[0].mxu0
    %303 = vdwg.mxu0
    %v305 = vsel %vm54, %v219, 0
    %307 = vmatprep.subr.mxu0 0.0
    %308 = vmatpush1.msra.mxu0 %v224
    %309 = vmatprep.subr.mxu0 0.0
    %310 = vmatpush1.msra.mxu0 %v225
    %311 = vmatprep.subr.mxu0 0.0
    %312 = vmatpush1.msra.mxu0 %v226
    %313 = vmatprep.subr.mxu0 0.0
    %314 = vmatpush1.msra.mxu0 %v227
    %315 = vmatprep.subr.mxu0 0.0
    %316 = vmatpush1.msra.mxu0 0.0
    %317 = vmatprep.subr.mxu0 0.0
    %318 = vmatpush1.msra.mxu0 0.0
    %319 = vmatprep.subr.mxu0 0.0
    %320 = vmatpush1.msra.mxu0 0.0
    %321 = vmatprep.subr.mxu0 0.0
    %322 = vmatpush1.msra.mxu0 0.0
    %323 = vmatprep.subr.mxu0 0.0
    %324 = vmatpush1.msra.mxu0 0.0
    %325 = vmatprep.subr.mxu0 0.0
    %326 = vmatpush1.msra.mxu0 0.0
    %327 = vmatprep.subr.mxu0 0.0
    %328 = vmatpush1.msra.mxu0 0.0
    %329 = vmatprep.subr.mxu0 0.0
    %330 = vmatpush1.msra.mxu0 0.0
    %331 = vmatprep.subr.mxu0 0.0
    %332 = vmatpush1.msra.mxu0 0.0
    %333 = vmatprep.subr.mxu0 0.0
    %334 = vmatpush1.msra.mxu0 0.0
    %335 = vmatprep.subr.mxu0 0.0
    %336 = vmatpush1.msra.mxu0 0.0
    %337 = vmatprep.subr.mxu0 0.0
    %338 = vmatpush1.msra.mxu0 0.0
    %339 = vmatprep.subr.mxu0 0.0
    %340 = vmatpush1.msra.mxu0 0.0
    %341 = vmatprep.subr.mxu0 0.0
    %342 = vmatpush1.msra.mxu0 0.0
    %343 = vmatprep.subr.mxu0 0.0
    %344 = vmatpush1.msra.mxu0 0.0
    %345 = vmatprep.subr.mxu0 0.0
    %346 = vmatpush1.msra.mxu0 0.0
    %347 = vmatprep.subr.mxu0 0.0
    %348 = vmatpush1.msra.mxu0 0.0
    %349 = vmatprep.subr.mxu0 0.0
    %350 = vmatpush1.msra.mxu0 0.0
    %351 = vmatprep.subr.mxu0 0.0
    %352 = vmatpush1.msra.mxu0 0.0
    %353 = vmatprep.subr.mxu0 0.0
    %354 = vmatpush1.msra.mxu0 0.0
    %355 = vmatprep.subr.mxu0 0.0
    %356 = vmatpush1.msra.mxu0 0.0
    %357 = vmatprep.subr.mxu0 0.0
    %358 = vmatpush1.msra.mxu0 0.0
    %359 = vmatprep.subr.mxu0 0.0
    %360 = vmatpush1.msra.mxu0 0.0
    %361 = vmatprep.subr.mxu0 0.0
    %362 = vmatpush1.msra.mxu0 0.0
    %363 = vmatprep.subr.mxu0 0.0
    %364 = vmatpush1.msra.mxu0 0.0
    %365 = vmatprep.subr.mxu0 0.0
    %366 = vmatpush1.msra.mxu0 0.0
    %367 = vmatprep.subr.mxu0 0.0
    %368 = vmatpush1.msra.mxu0 0.0
    %369 = vmatprep.subr.mxu0 0.0
    %370 = vmatpush1.msra.mxu0 0.0
    %371 = vmatprep.mubr.f32.mxu0 0.0
    %372 = vmatmul.mubr.f32.gmra.mrb[0].mxu0 %v305
    %v373 = vpop.f32.mrb[0].mxu0
    %v374 = vadd.f32 %v301, %v373
    %v375 = vpop.f32.mrb[0].mxu0
    %376 = vdwg.mxu0
    %v377 = vld [vmem:[%s8] sm:$0x1]
    %v379 = vlaneseq
    %v380 = vshrl.u32 %v379, 7
    %v381 = vsub.s32 0, %v380
    %v382 = vrot.slane %v377, %v381
    %v384 = vadd.f32 %v374, %v382
    %v385 = vmax.f32 %v384, 0.0
    %v386 = vld [vmem:[%s9] sm:$0xff]
    %v387 = vld [vmem:[%s9 + $0x8] sm:$0xff]
    %v388 = vld [vmem:[%s9 + $0x10] sm:$0xff]
    %v389 = vld [vmem:[%s9 + $0x18] sm:$0xff]
    %v390 = vld [vmem:[%s9 + $0x20] sm:$0xff]
    %v391 = vld [vmem:[%s9 + $0x28] sm:$0xff]
    %v392 = vld [vmem:[%s9 + $0x30] sm:$0xff]
    %v393 = vld [vmem:[%s9 + $0x38] sm:$0xff]
    %v394 = vld [vmem:[%s9 + $0x40] sm:$0xff]
    %v395 = vld [vmem:[%s9 + $0x48] sm:$0xff]
    %v396 = vld [vmem:[%s9 + $0x50] sm:$0xff]
    %v397 = vld [vmem:[%s9 + $0x58] sm:$0xff]
    %v398 = vld [vmem:[%s9 + $0x60] sm:$0xff]
    %v399 = vld [vmem:[%s9 + $0x68] sm:$0xff]
    %v400 = vld [vmem:[%s9 + $0x70] sm:$0xff]
    %v401 = vld [vmem:[%s9 + $0x78] sm:$0xff]
    %v402 = vld [vmem:[%s10] sm:$0x1]
    %v404 = vlaneseq
    %v405 = vshrl.u32 %v404, 7
    %v406 = vsub.s32 0, %v405
    %v407 = vrot.slane %v402, %v406
    %409 = vmatprep.subr.mxu0 0.0
    %410 = vmatpush1.msra.mxu0 %v386
    %411 = vmatprep.subr.mxu0 0.0
    %412 = vmatpush1.msra.mxu0 %v387
    %413 = vmatprep.subr.mxu0 0.0
    %414 = vmatpush1.msra.mxu0 %v388
    %415 = vmatprep.subr.mxu0 0.0
    %416 = vmatpush1.msra.mxu0 %v389
    %417 = vmatprep.subr.mxu0 0.0
    %418 = vmatpush1.msra.mxu0 %v390
    %419 = vmatprep.subr.mxu0 0.0
    %420 = vmatpush1.msra.mxu0 %v391
    %421 = vmatprep.subr.mxu0 0.0
    %422 = vmatpush1.msra.mxu0 %v392
    %423 = vmatprep.subr.mxu0 0.0
    %424 = vmatpush1.msra.mxu0 %v393
    %425 = vmatprep.subr.mxu0 0.0
    %426 = vmatpush1.msra.mxu0 %v394
    %427 = vmatprep.subr.mxu0 0.0
    %428 = vmatpush1.msra.mxu0 %v395
    %429 = vmatprep.subr.mxu0 0.0
    %430 = vmatpush1.msra.mxu0 %v396
    %431 = vmatprep.subr.mxu0 0.0
    %432 = vmatpush1.msra.mxu0 %v397
    %433 = vmatprep.subr.mxu0 0.0
    %434 = vmatpush1.msra.mxu0 %v398
    %435 = vmatprep.subr.mxu0 0.0
    %436 = vmatpush1.msra.mxu0 %v399
    %437 = vmatprep.subr.mxu0 0.0
    %438 = vmatpush1.msra.mxu0 %v400
    %439 = vmatprep.subr.mxu0 0.0
    %440 = vmatpush1.msra.mxu0 %v401
    %441 = vmatprep.subr.mxu0 0.0
    %442 = vmatpush1.msra.mxu0 0.0
    %443 = vmatprep.subr.mxu0 0.0
    %444 = vmatpush1.msra.mxu0 0.0
    %445 = vmatprep.subr.mxu0 0.0
    %446 = vmatpush1.msra.mxu0 0.0
    %447 = vmatprep.subr.mxu0 0.0
    %448 = vmatpush1.msra.mxu0 0.0
    %449 = vmatprep.subr.mxu0 0.0
    %450 = vmatpush1.msra.mxu0 0.0
    %451 = vmatprep.subr.mxu0 0.0
    %452 = vmatpush1.msra.mxu0 0.0
    %453 = vmatprep.subr.mxu0 0.0
    %454 = vmatpush1.msra.mxu0 0.0
    %455 = vmatprep.subr.mxu0 0.0
    %456 = vmatpush1.msra.mxu0 0.0
    %457 = vmatprep.subr.mxu0 0.0
    %458 = vmatpush1.msra.mxu0 0.0
    %459 = vmatprep.subr.mxu0 0.0
    %460 = vmatpush1.msra.mxu0 0.0
    %461 = vmatprep.subr.mxu0 0.0
    %462 = vmatpush1.msra.mxu0 0.0
    %463 = vmatprep.subr.mxu0 0.0
    %464 = vmatpush1.msra.mxu0 0.0
    %465 = vmatprep.subr.mxu0 0.0
    %466 = vmatpush1.msra.mxu0 0.0
    %467 = vmatprep.subr.mxu0 0.0
    %468 = vmatpush1.msra.mxu0 0.0
    %469 = vmatprep.subr.mxu0 0.0
    %470 = vmatpush1.msra.mxu0 0.0
    %471 = vmatprep.subr.mxu0 0.0
    %472 = vmatpush1.msra.mxu0 0.0
    %473 = vmatprep.mubr.f32.mxu0 0.0
    %474 = vmatmul.mubr.f32.gmra.mrb[0].mxu0 %v385
    %v475 = vpop.f32.mrb[0].mxu0
    %v476 = vadd.f32 %v407, %v475
    %v477 = vpop.f32.mrb[0].mxu0
    %478 = vdwg.mxu0
    %479 = vst.msk [vmem:[#allocation4] sm:$0xff] %vm54, %v476
    // Predicated region
    $region46: #{tpu_custom_call.1} parent=1 // pred_check
      _
    $region47: #{tpu_custom_call.1} parent=1 // pred_check_branch
      %481 = sbr.rel (0) target = $region49
    $region48: #{tpu_custom_call.1} parent=1 // pred_region
      %s483 = ssub.s32 128, 128
      %484 = vsyncadd [#allocation3], %s483
      %s486 = sshll.u32 [#allocation2], 4
      %s487 = int_to_ptr.vmem [resolvable:$true] %s486
      %489 = dma.vmem_to_hbm [thread:$0]  %s487, 128, %s11, [#allocation3]
    $region49: #{tpu_custom_call.1} parent=1 // pred_fallthru
      _
    // Predicated region
    $region50: #{tpu_custom_call.1} parent=1 // pred_check
      _
    $region51: #{tpu_custom_call.1} parent=1 // pred_check_branch
      %491 = sbr.rel (0) target = $region53
    $region52: #{tpu_custom_call.1} parent=1 // pred_region
      %s493 = ssub.s32 128, 128
      %494 = vsyncadd [#allocation5], %s493
      %s496 = sshll.u32 [#allocation4], 4
      %s497 = int_to_ptr.vmem [resolvable:$true] %s496
      %499 = dma.vmem_to_hbm [thread:$0]  %s497, 128, %s12, [#allocation5]
    $region53: #{tpu_custom_call.1} parent=1 // pred_fallthru
      _
    // Predicated region
    $region54: #{tpu_custom_call.1} parent=1 // pred_check
      _
    $region55: #{tpu_custom_call.1} parent=1 // pred_check_branch
      %501 = sbr.rel (0) target = $region57
    $region56: #{tpu_custom_call.1} parent=1 // pred_region
      %502 = dma.done [#allocation3], 128
    $region57: #{tpu_custom_call.1} parent=1 // pred_fallthru
      _
    // Predicated region
    $region58: #{tpu_custom_call.1} parent=1 // pred_check
      _
    $region59: #{tpu_custom_call.1} parent=1 // pred_check_branch
      %504 = sbr.rel (0) target = $region61
    $region60: #{tpu_custom_call.1} parent=1 // pred_region
      %505 = dma.done [#allocation5], 128
    $region61: #{tpu_custom_call.1} parent=1 // pred_fallthru
      _
    %506 = vsyncpa [#allocation3], 1
    %507 = vsyncpa [#allocation5], 1

</llo_original>
